<compile_context>
chip_gen: v5e
topology: v5e:2x2
jax: 0.10.0
libtpu: 0.0.40
codegen_flags: <defaults>
</compile_context>

<pallas_src>
import functools
from typing import NamedTuple, Tuple

import jax
import jax.numpy as jnp
from jax.experimental import pallas as pl
from jax.experimental.pallas import tpu as pltpu


def _pad_to(n: int, m: int) -> int:
    return ((n + m - 1) // m) * m


class PreparedPolicyParams(NamedTuple):
    slabs: Tuple[Tuple[jax.Array, jax.Array], ...]  # per layer: (W (in_pad,out_pad) bf16, b (1,out_pad) f32)
    padded_dims: Tuple[int, ...]                    # padded activation widths: [state, h0, h1, ...]
    head_offsets: Tuple[int, ...]                   # cumulative head column offsets (7 entries)
    out_width: int                                  # un-padded fused head width
    head_pad: int                                   # lane-padded fused head width
    state_size: int


def prepare_policy_params(params, *, lane_multiple: int = 128) -> PreparedPolicyParams:
    """One-time weight prep: transpose to (in, out), fuse the 6 heads into one lane-dense
    slab, zero-pad to lane multiples, cast weights to bf16. Cache the result across calls."""
    hidden = params["hidden"]
    heads = params["heads"]

    head_widths = [int(w.shape[0]) for (w, _) in heads]
    out_width = sum(head_widths)                    # 2+1+2+1+m_types+max_agents
    head_pad = _pad_to(out_width, lane_multiple)
    offsets = [0]
    for wd in head_widths:
        offsets.append(offsets[-1] + wd)

    state_size = int(hidden[0][0].shape[1])
    layer_dims = [state_size] + [int(w.shape[0]) for (w, _) in hidden]
    padded_dims = [_pad_to(d, lane_multiple) for d in layer_dims]

    def prep_t(w_t, b, in_pad, out_pad):
        w_t = jnp.asarray(w_t, jnp.float32)
        w_t = jnp.pad(w_t, ((0, in_pad - w_t.shape[0]), (0, out_pad - w_t.shape[1])))
        bb = jnp.pad(jnp.asarray(b, jnp.float32), (0, out_pad - b.shape[0]))
        return w_t.astype(jnp.bfloat16), bb.reshape(1, out_pad)

    slabs = []
    for i, (w, b) in enumerate(hidden):
        slabs.append(prep_t(jnp.asarray(w, jnp.float32).T, b,
                            padded_dims[i], padded_dims[i + 1]))
    # Fuse all six head weights/biases into one lane-dense (H_last, head_pad) slab.
    wh_t = jnp.concatenate([jnp.asarray(w, jnp.float32).T for (w, _) in heads], axis=1)
    bh = jnp.concatenate([jnp.asarray(b, jnp.float32) for (_, b) in heads], axis=0)
    slabs.append(prep_t(wh_t, bh, padded_dims[-1], head_pad))

    return PreparedPolicyParams(
        slabs=tuple(slabs),
        padded_dims=tuple(padded_dims),
        head_offsets=tuple(offsets),
        out_width=out_width,
        head_pad=head_pad,
        state_size=state_size,
    )


def _policy_kernel(x_ref, *refs, head_offsets, max_instruction):
    """Fused MLP + 6-head epilogue (2 full-slab EUP passes: one sigmoid, one exp).

    refs = (w0, b0, w1, b1, ..., w_heads, b_heads, o_ref); weights are pre-transposed
    (in, out) bf16, biases are (1, out) f32, x is bf16, accumulation/epilogue is f32.
    """
    o_ref = refs[-1]
    w_refs = refs[:-1]
    n_hidden = len(w_refs) // 2 - 1  # last (w, b) pair is the fused six-head layer

    h = x_ref[...]  # (TM, K_pad) bf16
    for li in range(n_hidden):
        w = w_refs[2 * li][...]
        b = w_refs[2 * li + 1][...]
        h = jnp.dot(h, w, preferred_element_type=jnp.float32) + b  # MXU, f32 accumulate
        h = jnp.maximum(h, 0.0).astype(jnp.bfloat16)               # ReLU, bf16 for next MXU

    wh = w_refs[-2][...]
    bh = w_refs[-1][...]
    z = jnp.dot(h, wh, preferred_element_type=jnp.float32) + bh    # (TM, HEAD_PAD) f32

    col = jax.lax.broadcasted_iota(jnp.int32, z.shape, dimension=1)
    o0, o1, o2, o3, o4, o5, o6 = head_offsets
    tanh_mask = ((col >= o0) & (col < o1)) | ((col >= o2) & (col < o3))  # xy, dxy
    send_mask = (col >= o1) & (col < o2)                                 # send: sigmoid
    mag_mask = (col >= o3) & (col < o4)                                  # mag: sigmoid * max_in
    mt_mask = (col >= o4) & (col < o5)                                   # message_type: softmax
    tg_mask = (col >= o5) & (col < o6)                                   # message_target: softmax
    sm_mask = mt_mask | tg_mask

    # ---- single sigmoid pass covers tanh + sigmoid heads: tanh(x) = 2*sigmoid(2x) - 1 ----
    u = jax.nn.sigmoid(jnp.where(tanh_mask, 2.0 * z, z))

    # ---- fused double softmax: one exp pass, segment-wise max / sum --------------------
    neg_big = jnp.float32(-1e30)
    m_mt = jnp.max(jnp.where(mt_mask, z, neg_big), axis=-1, keepdims=True)
    m_tg = jnp.max(jnp.where(tg_mask, z, neg_big), axis=-1, keepdims=True)
    m_seg = jnp.where(mt_mask, m_mt, m_tg)
    # exp(-1e30 - m_seg) underflows to exactly 0 on non-softmax / padded lanes.
    e = jnp.exp(jnp.where(sm_mask, z, neg_big) - m_seg)
    sum_mt = jnp.sum(jnp.where(mt_mask, e, 0.0), axis=-1, keepdims=True)
    sum_tg = jnp.sum(e, axis=-1, keepdims=True) - sum_mt   # non-softmax lanes are exactly 0
    # Exact reciprocal so each probability row sums to 1 (feeds Categorical downstream).
    inv = jnp.where(mt_mask,
                    pl.reciprocal(sum_mt, approx=False),
                    pl.reciprocal(sum_tg, approx=False))
    p = e * inv

    out = jnp.where(tanh_mask, 2.0 * u - 1.0, 0.0)                 # tanh heads
    out = jnp.where(send_mask, u, out)                             # sigmoid head
    out = jnp.where(mag_mask, u * jnp.float32(max_instruction), out)
    out = jnp.where(sm_mask, p, out)                               # both softmax heads
    o_ref[...] = out                                               # single lane-dense store


def policy_net_forward(x, prepped: PreparedPolicyParams, *, max_instruction=5, tile_m=512):
    """Pallas forward matching policy_net.forward (f32 math instead of PyTorch f64).

    `prepped` comes from prepare_policy_params() and should be reused across calls."""
    batch, state_size = x.shape
    assert state_size == prepped.state_size

    k_pad = prepped.padded_dims[0]
    head_pad = prepped.head_pad

    # ---- batch tiling: multiples of 16 rows (fully-packed bf16 vregs) ------------------
    b16 = _pad_to(batch, 16)
    tm = min(tile_m, b16)
    # v7x megacore: when batch permits, keep >= 2 grid steps so the "parallel" batch axis
    # can shard across both TensorCores (harmless on single-TC v5e/v6e).
    if b16 >= 32 and (b16 // tm) < 2:
        tm = _pad_to(b16 // 2, 16)
    b_pad = _pad_to(b16, tm)

    x_bf = jnp.pad(x.astype(jnp.bfloat16),
                   ((0, b_pad - batch), (0, k_pad - state_size)))

    # ---- BlockSpecs: batch-tiled activations, VMEM-resident weights (constant maps) ----
    in_specs = [pl.BlockSpec((tm, k_pad), lambda i: (i, 0))]
    flat_inputs = [x_bf]
    weight_bytes = 0
    for (wt, bb) in prepped.slabs:
        in_specs.append(pl.BlockSpec(wt.shape, lambda i: (0, 0)))
        in_specs.append(pl.BlockSpec(bb.shape, lambda i: (0, 0)))
        flat_inputs.extend([wt, bb])
        weight_bytes += wt.size * wt.dtype.itemsize + bb.size * bb.dtype.itemsize

    # ---- advisory cost estimate so XLA can overlap this latency-bound custom call ------
    dims = list(prepped.padded_dims) + [head_pad]
    flops = sum(2 * b_pad * dims[i] * dims[i + 1] for i in range(len(dims) - 1))
    transcendentals = 2 * b_pad * head_pad   # one sigmoid + one exp pass over the head slab
    bytes_accessed = weight_bytes + x_bf.size * 2 + b_pad * head_pad * 4

    # ---- explicit VMEM budget (don't inherit generation-specific scoped defaults) ------
    vmem_est = (2 * weight_bytes                  # double-buffered resident weight slabs
                + 4 * tm * k_pad * 2              # double-buffered bf16 x tiles
                + 4 * tm * head_pad * 4           # double-buffered f32 out tiles
                + (2 << 20))                      # headroom for epilogue intermediates
    vmem_limit = int(min(max(vmem_est, 16 << 20), 32 << 20))

    kernel = functools.partial(
        _policy_kernel,
        head_offsets=prepped.head_offsets,
        max_instruction=float(max_instruction),
    )

    out_padded = pl.pallas_call(
        kernel,
        out_shape=jax.ShapeDtypeStruct((b_pad, head_pad), jnp.float32),
        grid=(b_pad // tm,),
        in_specs=in_specs,
        out_specs=pl.BlockSpec((tm, head_pad), lambda i: (i, 0)),
        compiler_params=pltpu.CompilerParams(
            dimension_semantics=("parallel",),
            vmem_limit_bytes=vmem_limit,
        ),
        cost_estimate=pl.CostEstimate(
            flops=int(flops),
            transcendentals=int(transcendentals),
            bytes_accessed=int(bytes_accessed),
        ),
    )(*flat_inputs)

    return out_padded[:batch, :prepped.out_width]


# ------------------------- pure-JAX f32 reference -----------------------------
def _reference_forward(x, params, max_instruction):
    h = x
    for w, b in params["hidden"]:
        h = jax.nn.relu(h @ w.T + b)
    (xy_w, xy_b), (sd_w, sd_b), (dxy_w, dxy_b), (mg_w, mg_b), (mt_w, mt_b), (tg_w, tg_b) = params["heads"]
    xy = jnp.tanh(h @ xy_w.T + xy_b)
    send = jax.nn.sigmoid(h @ sd_w.T + sd_b)
    dxy = jnp.tanh(h @ dxy_w.T + dxy_b)
    mag = jax.nn.sigmoid(h @ mg_w.T + mg_b) * max_instruction
    mt = jax.nn.softmax(h @ mt_w.T + mt_b, axis=1)
    tg = jax.nn.softmax(h @ tg_w.T + tg_b, axis=1)
    return jnp.concatenate([xy, send, dxy, mag, mt, tg], axis=1)


if __name__ == "__main__":
    key = jax.random.PRNGKey(0)
    batch, state_size = 16, 64
    hidden_dims = [256, 256]
    max_agents, m_types, max_instruction = 5, 8, 5

    keys = iter(jax.random.split(key, 32))

    def linear_params(k, fan_in, fan_out):
        k1, k2 = jax.random.split(k)
        bound = 1.0 / (fan_in ** 0.5)
        w = jax.random.uniform(k1, (fan_out, fan_in), jnp.float32, -bound, bound)
        b = jax.random.uniform(k2, (fan_out,), jnp.float32, -bound, bound)
        return w, b

    dims = [state_size] + hidden_dims
    hidden = [linear_params(next(keys), dims[i], dims[i + 1]) for i in range(len(hidden_dims))]
    head_widths = [2, 1, 2, 1, m_types, max_agents]  # xy, send, dxy, mag, msg_type, msg_target
    heads = [linear_params(next(keys), hidden_dims[-1], w) for w in head_widths]
    params = {"hidden": hidden, "heads": heads}

    # One-time weight prep (transpose / fuse heads / pad / bf16 cast), cached across forwards.
    prepped = prepare_policy_params(params)
    jax.block_until_ready([w for wb in prepped.slabs for w in wb])

    # Single-tile path (batch=16).
    x = jax.random.normal(next(keys), (batch, state_size), jnp.float32)
    out = jax.block_until_ready(policy_net_forward(x, prepped, max_instruction=max_instruction))
    ref = _reference_forward(x, params, max_instruction)
    assert out.shape == (batch, sum(head_widths)), out.shape
    assert bool(jnp.all(jnp.isfinite(out)))
    max_err = float(jnp.max(jnp.abs(out - ref)))
    assert max_err < 5e-2, f"max abs error vs f32 reference (batch=16): {max_err}"

    # Multi-tile path (>=2 grid steps; exercises v7x megacore split + row padding).
    x2 = jax.random.normal(next(keys), (40, state_size), jnp.float32)
    out2 = jax.block_until_ready(policy_net_forward(x2, prepped, max_instruction=max_instruction))
    ref2 = _reference_forward(x2, params, max_instruction)
    assert out2.shape == (40, sum(head_widths)), out2.shape
    max_err2 = float(jnp.max(jnp.abs(out2 - ref2)))
    assert max_err2 < 5e-2, f"max abs error vs f32 reference (batch=40): {max_err2}"

    print("KERNEL_OK")
</pallas_src>

<mosaic_0001>
module attributes {stable_mosaic.version = 11 : i64} {
  func.func @_policy_kernel(%arg0: i32, %arg1: memref<16x128xbf16, #tpu.memory_space<vmem>>, %arg2: memref<128x256xbf16, #tpu.memory_space<vmem>>, %arg3: memref<1x256xf32, #tpu.memory_space<vmem>>, %arg4: memref<256x256xbf16, #tpu.memory_space<vmem>>, %arg5: memref<1x256xf32, #tpu.memory_space<vmem>>, %arg6: memref<256x128xbf16, #tpu.memory_space<vmem>>, %arg7: memref<1x128xf32, #tpu.memory_space<vmem>>, %arg8: memref<16x128xf32, #tpu.memory_space<vmem>>) attributes {dimension_semantics = [#tpu.dimension_semantics<parallel>], iteration_bounds = array<i64: 1>, scalar_prefetch = 0 : i64, scratch_operands = 0 : i64, tpu.core_type = #tpu.core_type<tc>, window_params = [{transform_indices = @transform_0, window_bounds = array<i64: 16, 128>}, {pipeline_mode = #tpu.pipeline_mode<synchronous>, transform_indices = @transform_1, window_bounds = array<i64: 128, 256>}, {pipeline_mode = #tpu.pipeline_mode<synchronous>, transform_indices = @transform_2, window_bounds = array<i64: 1, 256>}, {pipeline_mode = #tpu.pipeline_mode<synchronous>, transform_indices = @transform_3, window_bounds = array<i64: 256, 256>}, {pipeline_mode = #tpu.pipeline_mode<synchronous>, transform_indices = @transform_4, window_bounds = array<i64: 1, 256>}, {pipeline_mode = #tpu.pipeline_mode<synchronous>, transform_indices = @transform_5, window_bounds = array<i64: 256, 128>}, {pipeline_mode = #tpu.pipeline_mode<synchronous>, transform_indices = @transform_6, window_bounds = array<i64: 1, 128>}, {transform_indices = @transform_7, window_bounds = array<i64: 16, 128>}]} {
    %c0 = arith.constant 0 : index
    %c0_0 = arith.constant 0 : index
    %0 = vector.load %arg1[%c0, %c0_0] : memref<16x128xbf16, #tpu.memory_space<vmem>>, vector<16x128xbf16>
    %c0_1 = arith.constant 0 : index
    %c0_2 = arith.constant 0 : index
    %1 = vector.load %arg2[%c0_1, %c0_2] : memref<128x256xbf16, #tpu.memory_space<vmem>>, vector<128x256xbf16>
    %c0_3 = arith.constant 0 : index
    %c0_4 = arith.constant 0 : index
    %2 = vector.load %arg3[%c0_3, %c0_4] : memref<1x256xf32, #tpu.memory_space<vmem>>, vector<1x256xf32>
    %cst = arith.constant dense<0.000000e+00> : vector<16x256xf32>
    %3 = tpu.matmul %0, %1, %cst {dimension_numbers = #tpu.dot_dimension_numbers<[1], [0], [0], [1], [0, 0, 1, 1], [], []>} : vector<16x128xbf16>, vector<128x256xbf16>, vector<16x256xf32> -> vector<16x256xf32>
    %4 = vector.broadcast %2 : vector<1x256xf32> to vector<16x256xf32>
    %5 = arith.addf %3, %4 : vector<16x256xf32>
    %cst_5 = arith.constant 0.000000e+00 : f32
    %6 = vector.broadcast %cst_5 : f32 to vector<16x256xf32>
    %7 = arith.maximumf %5, %6 : vector<16x256xf32>
    %8 = arith.truncf %7 : vector<16x256xf32> to vector<16x256xbf16>
    %c0_6 = arith.constant 0 : index
    %c0_7 = arith.constant 0 : index
    %9 = vector.load %arg4[%c0_6, %c0_7] : memref<256x256xbf16, #tpu.memory_space<vmem>>, vector<256x256xbf16>
    %c0_8 = arith.constant 0 : index
    %c0_9 = arith.constant 0 : index
    %10 = vector.load %arg5[%c0_8, %c0_9] : memref<1x256xf32, #tpu.memory_space<vmem>>, vector<1x256xf32>
    %cst_10 = arith.constant dense<0.000000e+00> : vector<16x256xf32>
    %11 = tpu.matmul %8, %9, %cst_10 {dimension_numbers = #tpu.dot_dimension_numbers<[1], [0], [0], [1], [0, 0, 1, 1], [], []>} : vector<16x256xbf16>, vector<256x256xbf16>, vector<16x256xf32> -> vector<16x256xf32>
    %12 = vector.broadcast %10 : vector<1x256xf32> to vector<16x256xf32>
    %13 = arith.addf %11, %12 : vector<16x256xf32>
    %cst_11 = arith.constant 0.000000e+00 : f32
    %14 = vector.broadcast %cst_11 : f32 to vector<16x256xf32>
    %15 = arith.maximumf %13, %14 : vector<16x256xf32>
    %16 = arith.truncf %15 : vector<16x256xf32> to vector<16x256xbf16>
    %c0_12 = arith.constant 0 : index
    %c0_13 = arith.constant 0 : index
    %17 = vector.load %arg6[%c0_12, %c0_13] : memref<256x128xbf16, #tpu.memory_space<vmem>>, vector<256x128xbf16>
    %c0_14 = arith.constant 0 : index
    %c0_15 = arith.constant 0 : index
    %18 = vector.load %arg7[%c0_14, %c0_15] : memref<1x128xf32, #tpu.memory_space<vmem>>, vector<1x128xf32>
    %cst_16 = arith.constant dense<0.000000e+00> : vector<16x128xf32>
    %19 = tpu.matmul %16, %17, %cst_16 {dimension_numbers = #tpu.dot_dimension_numbers<[1], [0], [0], [1], [0, 0, 1, 1], [], []>} : vector<16x256xbf16>, vector<256x128xbf16>, vector<16x128xf32> -> vector<16x128xf32>
    %20 = vector.broadcast %18 : vector<1x128xf32> to vector<16x128xf32>
    %21 = arith.addf %19, %20 : vector<16x128xf32>
    %22 = tpu.iota {dimensions = array<i32: 1>} : vector<16x128xi32>
    %c0_i32 = arith.constant 0 : i32
    %23 = vector.broadcast %c0_i32 : i32 to vector<16x128xi32>
    %24 = arith.cmpi sge, %22, %23 : vector<16x128xi32>
    %c2_i32 = arith.constant 2 : i32
    %25 = vector.broadcast %c2_i32 : i32 to vector<16x128xi32>
    %26 = arith.cmpi slt, %22, %25 : vector<16x128xi32>
    %27 = arith.andi %24, %26 : vector<16x128xi1>
    %c3_i32 = arith.constant 3 : i32
    %28 = vector.broadcast %c3_i32 : i32 to vector<16x128xi32>
    %29 = arith.cmpi sge, %22, %28 : vector<16x128xi32>
    %c5_i32 = arith.constant 5 : i32
    %30 = vector.broadcast %c5_i32 : i32 to vector<16x128xi32>
    %31 = arith.cmpi slt, %22, %30 : vector<16x128xi32>
    %32 = arith.andi %29, %31 : vector<16x128xi1>
    %33 = arith.ori %27, %32 : vector<16x128xi1>
    %c2_i32_17 = arith.constant 2 : i32
    %34 = vector.broadcast %c2_i32_17 : i32 to vector<16x128xi32>
    %35 = arith.cmpi sge, %22, %34 : vector<16x128xi32>
    %c3_i32_18 = arith.constant 3 : i32
    %36 = vector.broadcast %c3_i32_18 : i32 to vector<16x128xi32>
    %37 = arith.cmpi slt, %22, %36 : vector<16x128xi32>
    %38 = arith.andi %35, %37 : vector<16x128xi1>
    %c5_i32_19 = arith.constant 5 : i32
    %39 = vector.broadcast %c5_i32_19 : i32 to vector<16x128xi32>
    %40 = arith.cmpi sge, %22, %39 : vector<16x128xi32>
    %c6_i32 = arith.constant 6 : i32
    %41 = vector.broadcast %c6_i32 : i32 to vector<16x128xi32>
    %42 = arith.cmpi slt, %22, %41 : vector<16x128xi32>
    %43 = arith.andi %40, %42 : vector<16x128xi1>
    %c6_i32_20 = arith.constant 6 : i32
    %44 = vector.broadcast %c6_i32_20 : i32 to vector<16x128xi32>
    %45 = arith.cmpi sge, %22, %44 : vector<16x128xi32>
    %c14_i32 = arith.constant 14 : i32
    %46 = vector.broadcast %c14_i32 : i32 to vector<16x128xi32>
    %47 = arith.cmpi slt, %22, %46 : vector<16x128xi32>
    %48 = arith.andi %45, %47 : vector<16x128xi1>
    %c14_i32_21 = arith.constant 14 : i32
    %49 = vector.broadcast %c14_i32_21 : i32 to vector<16x128xi32>
    %50 = arith.cmpi sge, %22, %49 : vector<16x128xi32>
    %c19_i32 = arith.constant 19 : i32
    %51 = vector.broadcast %c19_i32 : i32 to vector<16x128xi32>
    %52 = arith.cmpi slt, %22, %51 : vector<16x128xi32>
    %53 = arith.andi %50, %52 : vector<16x128xi1>
    %54 = arith.ori %48, %53 : vector<16x128xi1>
    %cst_22 = arith.constant 2.000000e+00 : f32
    %55 = vector.broadcast %cst_22 : f32 to vector<16x128xf32>
    %56 = arith.mulf %55, %21 : vector<16x128xf32>
    %57 = arith.select %33, %56, %21 : vector<16x128xi1>, vector<16x128xf32>
    %58 = arith.negf %57 : vector<16x128xf32>
    %59 = math.exp %58 : vector<16x128xf32>
    %cst_23 = arith.constant 1.000000e+00 : f32
    %60 = vector.broadcast %cst_23 : f32 to vector<16x128xf32>
    %61 = arith.addf %60, %59 : vector<16x128xf32>
    %62 = arith.divf %60, %61 : vector<16x128xf32>
    %cst_24 = arith.constant -1.000000e+30 : f32
    %63 = vector.broadcast %cst_24 : f32 to vector<16x128xf32>
    %64 = arith.select %48, %21, %63 : vector<16x128xi1>, vector<16x128xf32>
    %cst_25 = arith.constant dense<0xFF800000> : vector<16xf32>
    %65 = vector.multi_reduction <maximumf>, %64, %cst_25 [1] : vector<16x128xf32> to vector<16xf32>
    %66 = vector.shape_cast %65 : vector<16xf32> to vector<16x1xf32>
    %cst_26 = arith.constant -1.000000e+30 : f32
    %67 = vector.broadcast %cst_26 : f32 to vector<16x128xf32>
    %68 = arith.select %53, %21, %67 : vector<16x128xi1>, vector<16x128xf32>
    %cst_27 = arith.constant dense<0xFF800000> : vector<16xf32>
    %69 = vector.multi_reduction <maximumf>, %68, %cst_27 [1] : vector<16x128xf32> to vector<16xf32>
    %70 = vector.shape_cast %69 : vector<16xf32> to vector<16x1xf32>
    %71 = vector.shape_cast %66 : vector<16x1xf32> to vector<16x1xf32>
    %72 = vector.broadcast %71 : vector<16x1xf32> to vector<16x128xf32>
    %73 = vector.shape_cast %70 : vector<16x1xf32> to vector<16x1xf32>
    %74 = vector.broadcast %73 : vector<16x1xf32> to vector<16x128xf32>
    %75 = arith.select %48, %72, %74 : vector<16x128xi1>, vector<16x128xf32>
    %cst_28 = arith.constant -1.000000e+30 : f32
    %76 = vector.broadcast %cst_28 : f32 to vector<16x128xf32>
    %77 = arith.select %54, %21, %76 : vector<16x128xi1>, vector<16x128xf32>
    %78 = arith.subf %77, %75 : vector<16x128xf32>
    %79 = math.exp %78 : vector<16x128xf32>
    %cst_29 = arith.constant 0.000000e+00 : f32
    %80 = vector.broadcast %cst_29 : f32 to vector<16x128xf32>
    %81 = arith.select %48, %79, %80 : vector<16x128xi1>, vector<16x128xf32>
    %cst_30 = arith.constant dense<0.000000e+00> : vector<16xf32>
    %82 = vector.multi_reduction <add>, %81, %cst_30 [1] : vector<16x128xf32> to vector<16xf32>
    %83 = vector.shape_cast %82 : vector<16xf32> to vector<16x1xf32>
    %cst_31 = arith.constant dense<0.000000e+00> : vector<16xf32>
    %84 = vector.multi_reduction <add>, %79, %cst_31 [1] : vector<16x128xf32> to vector<16xf32>
    %85 = vector.shape_cast %84 : vector<16xf32> to vector<16x1xf32>
    %86 = arith.subf %85, %83 : vector<16x1xf32>
    %87 = tpu.reciprocal %83 : vector<16x1xf32> -> vector<16x1xf32>
    %88 = tpu.reciprocal %86 : vector<16x1xf32> -> vector<16x1xf32>
    %89 = vector.shape_cast %87 : vector<16x1xf32> to vector<16x1xf32>
    %90 = vector.broadcast %89 : vector<16x1xf32> to vector<16x128xf32>
    %91 = vector.shape_cast %88 : vector<16x1xf32> to vector<16x1xf32>
    %92 = vector.broadcast %91 : vector<16x1xf32> to vector<16x128xf32>
    %93 = arith.select %48, %90, %92 : vector<16x128xi1>, vector<16x128xf32>
    %94 = arith.mulf %79, %93 : vector<16x128xf32>
    %cst_32 = arith.constant 2.000000e+00 : f32
    %95 = vector.broadcast %cst_32 : f32 to vector<16x128xf32>
    %96 = arith.mulf %95, %62 : vector<16x128xf32>
    %cst_33 = arith.constant 1.000000e+00 : f32
    %97 = vector.broadcast %cst_33 : f32 to vector<16x128xf32>
    %98 = arith.subf %96, %97 : vector<16x128xf32>
    %cst_34 = arith.constant 0.000000e+00 : f32
    %99 = vector.broadcast %cst_34 : f32 to vector<16x128xf32>
    %100 = arith.select %33, %98, %99 : vector<16x128xi1>, vector<16x128xf32>
    %101 = arith.select %38, %62, %100 : vector<16x128xi1>, vector<16x128xf32>
    %cst_35 = arith.constant 5.000000e+00 : f32
    %102 = vector.broadcast %cst_35 : f32 to vector<16x128xf32>
    %103 = arith.mulf %62, %102 : vector<16x128xf32>
    %104 = arith.select %43, %103, %101 : vector<16x128xi1>, vector<16x128xf32>
    %105 = arith.select %54, %94, %104 : vector<16x128xi1>, vector<16x128xf32>
    %c0_36 = arith.constant 0 : index
    %c0_37 = arith.constant 0 : index
    %106 = vector.load %arg8[%c0_36, %c0_37] : memref<16x128xf32, #tpu.memory_space<vmem>>, vector<16x128xf32>
    tpu.vector_store %arg8[%c0_36, %c0_37], %105 {strides = array<i32>} : memref<16x128xf32, #tpu.memory_space<vmem>>, vector<16x128xf32>,
    return
  }
  func.func @transform_0(%arg0: i32) -> (i32, i32) {
    %c0_i32 = arith.constant 0 : i32
    %c0_i32_0 = arith.constant 0 : i32
    return %arg0, %c0_i32 : i32, i32
  }
  func.func @transform_1(%arg0: i32) -> (i32, i32) {
    %c0_i32 = arith.constant 0 : i32
    %c0_i32_0 = arith.constant 0 : i32
    %c0_i32_1 = arith.constant 0 : i32
    return %c0_i32, %c0_i32_0 : i32, i32
  }
  func.func @transform_2(%arg0: i32) -> (i32, i32) {
    %c0_i32 = arith.constant 0 : i32
    %c0_i32_0 = arith.constant 0 : i32
    %c0_i32_1 = arith.constant 0 : i32
    return %c0_i32, %c0_i32_0 : i32, i32
  }
  func.func @transform_3(%arg0: i32) -> (i32, i32) {
    %c0_i32 = arith.constant 0 : i32
    %c0_i32_0 = arith.constant 0 : i32
    %c0_i32_1 = arith.constant 0 : i32
    return %c0_i32, %c0_i32_0 : i32, i32
  }
  func.func @transform_4(%arg0: i32) -> (i32, i32) {
    %c0_i32 = arith.constant 0 : i32
    %c0_i32_0 = arith.constant 0 : i32
    %c0_i32_1 = arith.constant 0 : i32
    return %c0_i32, %c0_i32_0 : i32, i32
  }
  func.func @transform_5(%arg0: i32) -> (i32, i32) {
    %c0_i32 = arith.constant 0 : i32
    %c0_i32_0 = arith.constant 0 : i32
    %c0_i32_1 = arith.constant 0 : i32
    return %c0_i32, %c0_i32_0 : i32, i32
  }
  func.func @transform_6(%arg0: i32) -> (i32, i32) {
    %c0_i32 = arith.constant 0 : i32
    %c0_i32_0 = arith.constant 0 : i32
    %c0_i32_1 = arith.constant 0 : i32
    return %c0_i32, %c0_i32_0 : i32, i32
  }
  func.func @transform_7(%arg0: i32) -> (i32, i32) {
    %c0_i32 = arith.constant 0 : i32
    %c0_i32_0 = arith.constant 0 : i32
    return %arg0, %c0_i32 : i32, i32
  }
}

</mosaic_0001>

<llo_original>
// kernel: tpu_custom_call.1
$region0: #{tpu_custom_call.1}
  #allocation0 [shape = 'u32[]', space=smem, size = 0x4, offset = 0x4, fixed_abs, tag = 'smem constant byte address 0x4 - core index']
  #allocation1 [shape = 'u32[72,128]{1,0:T(1,128)}', space=vmem, size = 0x9000, scoped, tag = 'internal scratch']
  %s0 = inlined_call_operand.hbm [shape: bf16[16,128], index: 0, kind: input, shape index: {}]
  %s1 = inlined_call_operand.hbm [shape: bf16[128,256], index: 1, kind: input, shape index: {}]
  %s2 = inlined_call_operand.hbm [shape: f32[1,256], index: 2, kind: input, shape index: {}]
  %s3 = inlined_call_operand.hbm [shape: bf16[256,256], index: 3, kind: input, shape index: {}]
  %s4 = inlined_call_operand.vmem [shape: f32[1,256], index: 4, kind: input, shape index: {}]
  %s5 = inlined_call_operand.hbm [shape: bf16[256,128], index: 5, kind: input, shape index: {}]
  %s6 = inlined_call_operand.vmem [shape: f32[1,128], index: 6, kind: input, shape index: {}]
  %s7 = inlined_call_operand.hbm [shape: f32[16,128], index: 7, kind: output, shape index: {}]
  %s8 = sld [smem:[#allocation0]]
  $region58: #{tpu_custom_call.1} parent=0
    _
  %s10 = ssub.s32 1, %s8
  %s11 = scalar_select 0, %s10, %s8
  $region1: #{tpu_custom_call.1} parent=0
    #allocation2 [shape = 'u8[4096]{0}', space=vmem, size = 0x1000, scoped, tag = 'input window, operand 0, single buffered']
    #allocation3 [shape = 's32[1]{0}', space=sflag, size = 0x4, scoped, tag = 'scoped memory for tpu_custom_call.1']
    #allocation4 [shape = 's32[1]{0}', space=sflag, size = 0x4, scoped, tag = 'scoped memory for tpu_custom_call.1']
    #allocation5 [shape = 'u8[65536]{0}', space=vmem, size = 0x10000, scoped, tag = 'input window, operand 1, single buffered']
    #allocation6 [shape = 's32[1]{0}', space=sflag, size = 0x4, scoped, tag = 'scoped memory for tpu_custom_call.1']
    #allocation7 [shape = 'u8[1024]{0}', space=vmem, size = 0x400, scoped, tag = 'input window, operand 2, single buffered']
    #allocation8 [shape = 'u8[131072]{0}', space=vmem, size = 0x20000, scoped, tag = 'input window, operand 3, single buffered']
    #allocation9 [shape = 's32[1]{0}', space=sflag, size = 0x4, scoped, tag = 'scoped memory for tpu_custom_call.1']
    #allocation10 [shape = 'u8[65536]{0}', space=vmem, size = 0x10000, scoped, tag = 'input window, operand 5, single buffered']
    #allocation11 [shape = 'u8[8192]{0}', space=vmem, size = 0x2000, scoped, tag = 'output window, operand 0, single buffered']
    %12 = vsyncpa [#allocation3], 0
    %13 = vsyncpa [#allocation6], 0
    %14 = vsyncpa [#allocation9], 0
    %15 = vsyncpa [#allocation4], 0
    // Predicated region
    $region2: #{tpu_custom_call.1} parent=1 // pred_check
      _
    $region3: #{tpu_custom_call.1} parent=1 // pred_check_branch
      %17 = sbr.rel (0) target = $region5
    $region4: #{tpu_custom_call.1} parent=1 // pred_region
      %19 = vsyncadd [#allocation3], 0
      %s20 = sshll.u32 %s0, 4
      %s21 = int_to_ptr.hbm [resolvable:$true] %s20
      %s22 = sshll.u32 [#allocation2], 4
      %s23 = int_to_ptr.vmem [resolvable:$true] %s22
      %28 = dma.hbm_to_vmem [thread:$0]  %s21, 128, %s23, [#allocation3], 64, 64, 4
    $region5: #{tpu_custom_call.1} parent=1 // pred_fallthru
      _
    // Predicated region
    $region6: #{tpu_custom_call.1} parent=1 // pred_check
      _
    $region7: #{tpu_custom_call.1} parent=1 // pred_check_branch
      %30 = sbr.rel (0) target = $region9
    $region8: #{tpu_custom_call.1} parent=1 // pred_region
      %32 = vsyncadd [#allocation6], 0
      %s33 = sshll.u32 %s1, 4
      %s34 = int_to_ptr.hbm [resolvable:$true] %s33
      %s35 = sshll.u32 [#allocation5], 4
      %s36 = int_to_ptr.vmem [resolvable:$true] %s35
      %41 = dma.hbm_to_vmem [thread:$0]  %s34, 2048, %s36, [#allocation6], 128, 128, 8
    $region9: #{tpu_custom_call.1} parent=1 // pred_fallthru
      _
    // Predicated region
    $region10: #{tpu_custom_call.1} parent=1 // pred_check
      _
    $region11: #{tpu_custom_call.1} parent=1 // pred_check_branch
      %43 = sbr.rel (0) target = $region13
    $region12: #{tpu_custom_call.1} parent=1 // pred_region
      %45 = vsyncadd [#allocation6], 0
      %s47 = sshll.u32 %s2, 4
      %s48 = int_to_ptr.hbm [resolvable:$true] %s47
      %s49 = sshll.u32 [#allocation7], 4
      %s50 = int_to_ptr.vmem [resolvable:$true] %s49
      %52 = dma.hbm_to_vmem [thread:$0]  %s48, 32, %s50, [#allocation6]
    $region13: #{tpu_custom_call.1} parent=1 // pred_fallthru
      _
    // Predicated region
    $region14: #{tpu_custom_call.1} parent=1 // pred_check
      _
    $region15: #{tpu_custom_call.1} parent=1 // pred_check_branch
      %54 = sbr.rel (0) target = $region17
    $region16: #{tpu_custom_call.1} parent=1 // pred_region
      %56 = vsyncadd [#allocation9], 0
      %s57 = sshll.u32 %s3, 4
      %s58 = int_to_ptr.hbm [resolvable:$true] %s57
      %s59 = sshll.u32 [#allocation8], 4
      %s60 = int_to_ptr.vmem [resolvable:$true] %s59
      %65 = dma.hbm_to_vmem [thread:$0]  %s58, 4096, %s60, [#allocation9], 128, 128, 8
    $region17: #{tpu_custom_call.1} parent=1 // pred_fallthru
      _
    // Predicated region
    $region18: #{tpu_custom_call.1} parent=1 // pred_check
      _
    $region19: #{tpu_custom_call.1} parent=1 // pred_check_branch
      %67 = sbr.rel (0) target = $region21
    $region20: #{tpu_custom_call.1} parent=1 // pred_region
      _
    $region21: #{tpu_custom_call.1} parent=1 // pred_fallthru
      _
    // Predicated region
    $region22: #{tpu_custom_call.1} parent=1 // pred_check
      _
    $region23: #{tpu_custom_call.1} parent=1 // pred_check_branch
      %69 = sbr.rel (0) target = $region25
    $region24: #{tpu_custom_call.1} parent=1 // pred_region
      %71 = vsyncadd [#allocation9], 0
      %s72 = sshll.u32 %s5, 4
      %s73 = int_to_ptr.hbm [resolvable:$true] %s72
      %s74 = sshll.u32 [#allocation10], 4
      %s75 = int_to_ptr.vmem [resolvable:$true] %s74
      %80 = dma.hbm_to_vmem [thread:$0]  %s73, 2048, %s75, [#allocation9], 64, 64, 4
    $region25: #{tpu_custom_call.1} parent=1 // pred_fallthru
      _
    // Predicated region
    $region26: #{tpu_custom_call.1} parent=1 // pred_check
      _
    $region27: #{tpu_custom_call.1} parent=1 // pred_check_branch
      %82 = sbr.rel (0) target = $region29
    $region28: #{tpu_custom_call.1} parent=1 // pred_region
      _
    $region29: #{tpu_custom_call.1} parent=1 // pred_fallthru
      _
    // Predicated region
    $region30: #{tpu_custom_call.1} parent=1 // pred_check
      _
    $region31: #{tpu_custom_call.1} parent=1 // pred_check_branch
      %84 = sbr.rel (0) target = $region33
    $region32: #{tpu_custom_call.1} parent=1 // pred_region
      %86 = dma.done [#allocation3], 128
    $region33: #{tpu_custom_call.1} parent=1 // pred_fallthru
      _
    // Predicated region
    $region34: #{tpu_custom_call.1} parent=1 // pred_check
      _
    $region35: #{tpu_custom_call.1} parent=1 // pred_check_branch
      %88 = sbr.rel (0) target = $region37
    $region36: #{tpu_custom_call.1} parent=1 // pred_region
      %90 = dma.done [#allocation6], 2048
    $region37: #{tpu_custom_call.1} parent=1 // pred_fallthru
      _
    // Predicated region
    $region38: #{tpu_custom_call.1} parent=1 // pred_check
      _
    $region39: #{tpu_custom_call.1} parent=1 // pred_check_branch
      %92 = sbr.rel (0) target = $region41
    $region40: #{tpu_custom_call.1} parent=1 // pred_region
      %94 = dma.done [#allocation6], 32
    $region41: #{tpu_custom_call.1} parent=1 // pred_fallthru
      _
    // Predicated region
    $region42: #{tpu_custom_call.1} parent=1 // pred_check
      _
    $region43: #{tpu_custom_call.1} parent=1 // pred_check_branch
      %96 = sbr.rel (0) target = $region45
    $region44: #{tpu_custom_call.1} parent=1 // pred_region
      %98 = dma.done [#allocation9], 4096
    $region45: #{tpu_custom_call.1} parent=1 // pred_fallthru
      _
    // Predicated region
    $region46: #{tpu_custom_call.1} parent=1 // pred_check
      _
    $region47: #{tpu_custom_call.1} parent=1 // pred_check_branch
      %100 = sbr.rel (0) target = $region49
    $region48: #{tpu_custom_call.1} parent=1 // pred_region
      %102 = dma.done [#allocation9], 2048
    $region49: #{tpu_custom_call.1} parent=1 // pred_fallthru
      _
    %v103 = vld [vmem:[#allocation2] sm:$0xf]
    %v104 = vld [vmem:[#allocation2 + $0x4] sm:$0xf]
    %v105 = vld [vmem:[#allocation5] sm:$0xff]
    %v106 = vld [vmem:[#allocation5 + $0x8] sm:$0xff]
    %v107 = vld [vmem:[#allocation5 + $0x10] sm:$0xff]
    %v108 = vld [vmem:[#allocation5 + $0x18] sm:$0xff]
    %v109 = vld [vmem:[#allocation5 + $0x20] sm:$0xff]
    %v110 = vld [vmem:[#allocation5 + $0x28] sm:$0xff]
    %v111 = vld [vmem:[#allocation5 + $0x30] sm:$0xff]
    %v112 = vld [vmem:[#allocation5 + $0x38] sm:$0xff]
    %v113 = vld [vmem:[#allocation5 + $0x40] sm:$0xff]
    %v114 = vld [vmem:[#allocation5 + $0x48] sm:$0xff]
    %v115 = vld [vmem:[#allocation5 + $0x50] sm:$0xff]
    %v116 = vld [vmem:[#allocation5 + $0x58] sm:$0xff]
    %v117 = vld [vmem:[#allocation5 + $0x60] sm:$0xff]
    %v118 = vld [vmem:[#allocation5 + $0x68] sm:$0xff]
    %v119 = vld [vmem:[#allocation5 + $0x70] sm:$0xff]
    %v120 = vld [vmem:[#allocation5 + $0x78] sm:$0xff]
    %v121 = vld [vmem:[#allocation7] sm:$0x3]
    %v123 = vperm.slane %v121, 0
    %v124 = vperm.slane %v121, 1
    %v129 = vunpack.c.l.b16 %v103
    %v130 = vunpack.c.l.b16 %v104
    %v131 = vpack.c.b16 %v130, %v129
    %v149 = vunpack.c.l.b16 %v105
    %v150 = vunpack.c.h.b16 %v105
    %v151 = vunpack.c.l.b16 %v106
    %v152 = vunpack.c.h.b16 %v106
    %v153 = vunpack.c.l.b16 %v107
    %v154 = vunpack.c.h.b16 %v107
    %v155 = vunpack.c.l.b16 %v108
    %v156 = vunpack.c.h.b16 %v108
    %v157 = vunpack.c.l.b16 %v109
    %v158 = vunpack.c.h.b16 %v109
    %v159 = vunpack.c.l.b16 %v110
    %v160 = vunpack.c.h.b16 %v110
    %v161 = vunpack.c.l.b16 %v111
    %v162 = vunpack.c.h.b16 %v111
    %v163 = vunpack.c.l.b16 %v112
    %v164 = vunpack.c.h.b16 %v112
    %v165 = vunpack.c.l.b16 %v113
    %v166 = vunpack.c.h.b16 %v113
    %v167 = vunpack.c.l.b16 %v114
    %v168 = vunpack.c.h.b16 %v114
    %v169 = vunpack.c.l.b16 %v115
    %v170 = vunpack.c.h.b16 %v115
    %v171 = vunpack.c.l.b16 %v116
    %v172 = vunpack.c.h.b16 %v116
    %v173 = vunpack.c.l.b16 %v117
    %v174 = vunpack.c.h.b16 %v117
    %v175 = vunpack.c.l.b16 %v118
    %v176 = vunpack.c.h.b16 %v118
    %v177 = vunpack.c.l.b16 %v119
    %v178 = vunpack.c.h.b16 %v119
    %v179 = vunpack.c.l.b16 %v120
    %v180 = vunpack.c.h.b16 %v120
    %v181 = vpack.c.b16 %v151, %v149
    %v182 = vpack.c.b16 %v152, %v150
    %v183 = vpack.c.b16 %v155, %v153
    %v184 = vpack.c.b16 %v156, %v154
    %v185 = vpack.c.b16 %v159, %v157
    %v186 = vpack.c.b16 %v160, %v158
    %v187 = vpack.c.b16 %v163, %v161
    %v188 = vpack.c.b16 %v164, %v162
    %v189 = vpack.c.b16 %v167, %v165
    %v190 = vpack.c.b16 %v168, %v166
    %v191 = vpack.c.b16 %v171, %v169
    %v192 = vpack.c.b16 %v172, %v170
    %v193 = vpack.c.b16 %v175, %v173
    %v194 = vpack.c.b16 %v176, %v174
    %v195 = vpack.c.b16 %v179, %v177
    %v196 = vpack.c.b16 %v180, %v178
    %213 = vmatpush.bf16.msra.mxu0 %v195
    %214 = vmatpush.bf16.msra.mxu0 %v193
    %215 = vmatpush.bf16.msra.mxu0 %v191
    %216 = vmatpush.bf16.msra.mxu0 %v189
    %217 = vmatpush.bf16.msra.mxu0 %v187
    %218 = vmatpush.bf16.msra.mxu0 %v185
    %219 = vmatpush.bf16.msra.mxu0 %v183
    %220 = vmatpush.bf16.msra.mxu0 %v181
    %221 = vmatmul.bf16.gmra.mxu0 %v131
    %v222 = vpop.f32.mrf.mxu0
    %v223 = vadd.f32 %v123, %v222
    %v224 = vpop.f32.mrf.mxu0
    %v225 = vadd.f32 %v123, %v224
    %226 = vdwg.mxu0
    %227 = vmatpush.bf16.msra.mxu0 %v196
    %228 = vmatpush.bf16.msra.mxu0 %v194
    %229 = vmatpush.bf16.msra.mxu0 %v192
    %230 = vmatpush.bf16.msra.mxu0 %v190
    %231 = vmatpush.bf16.msra.mxu0 %v188
    %232 = vmatpush.bf16.msra.mxu0 %v186
    %233 = vmatpush.bf16.msra.mxu0 %v184
    %234 = vmatpush.bf16.msra.mxu0 %v182
    %235 = vmatmul.bf16.gmra.mxu0 %v131
    %v236 = vpop.f32.mrf.mxu0
    %v237 = vadd.f32 %v124, %v236
    %v238 = vpop.f32.mrf.mxu0
    %v239 = vadd.f32 %v124, %v238
    %240 = vdwg.mxu0
    %v241 = vmax.f32 %v223, 0.0
    %v242 = vmax.f32 %v237, 0.0
    %v243 = vmax.f32 %v225, 0.0
    %v244 = vmax.f32 %v239, 0.0
    %v245 = vpack.c.bf16 %v243, %v241
    %v246 = vpack.c.bf16 %v244, %v242
    %v247 = vld [vmem:[#allocation8] sm:$0xff]
    %v248 = vld [vmem:[#allocation8 + $0x8] sm:$0xff]
    %v249 = vld [vmem:[#allocation8 + $0x10] sm:$0xff]
    %v250 = vld [vmem:[#allocation8 + $0x18] sm:$0xff]
    %v251 = vld [vmem:[#allocation8 + $0x20] sm:$0xff]
    %v252 = vld [vmem:[#allocation8 + $0x28] sm:$0xff]
    %v253 = vld [vmem:[#allocation8 + $0x30] sm:$0xff]
    %v254 = vld [vmem:[#allocation8 + $0x38] sm:$0xff]
    %v255 = vld [vmem:[#allocation8 + $0x40] sm:$0xff]
    %v256 = vld [vmem:[#allocation8 + $0x48] sm:$0xff]
    %v257 = vld [vmem:[#allocation8 + $0x50] sm:$0xff]
    %v258 = vld [vmem:[#allocation8 + $0x58] sm:$0xff]
    %v259 = vld [vmem:[#allocation8 + $0x60] sm:$0xff]
    %v260 = vld [vmem:[#allocation8 + $0x68] sm:$0xff]
    %v261 = vld [vmem:[#allocation8 + $0x70] sm:$0xff]
    %v262 = vld [vmem:[#allocation8 + $0x78] sm:$0xff]
    %v263 = vld [vmem:[#allocation8 + $0x80] sm:$0xff]
    %v264 = vld [vmem:[#allocation8 + $0x88] sm:$0xff]
    %v265 = vld [vmem:[#allocation8 + $0x90] sm:$0xff]
    %v266 = vld [vmem:[#allocation8 + $0x98] sm:$0xff]
    %v267 = vld [vmem:[#allocation8 + $0xa0] sm:$0xff]
    %v268 = vld [vmem:[#allocation8 + $0xa8] sm:$0xff]
    %v269 = vld [vmem:[#allocation8 + $0xb0] sm:$0xff]
    %v270 = vld [vmem:[#allocation8 + $0xb8] sm:$0xff]
    %v271 = vld [vmem:[#allocation8 + $0xc0] sm:$0xff]
    %v272 = vld [vmem:[#allocation8 + $0xc8] sm:$0xff]
    %v273 = vld [vmem:[#allocation8 + $0xd0] sm:$0xff]
    %v274 = vld [vmem:[#allocation8 + $0xd8] sm:$0xff]
    %v275 = vld [vmem:[#allocation8 + $0xe0] sm:$0xff]
    %v276 = vld [vmem:[#allocation8 + $0xe8] sm:$0xff]
    %v277 = vld [vmem:[#allocation8 + $0xf0] sm:$0xff]
    %v278 = vld [vmem:[#allocation8 + $0xf8] sm:$0xff]
    %v279 = vld [vmem:[%s4] sm:$0x3]
    %v281 = vperm.slane %v279, 0
    %v282 = vperm.slane %v279, 1
    %v317 = vunpack.c.l.b16 %v247
    %v318 = vunpack.c.h.b16 %v247
    %v319 = vunpack.c.l.b16 %v248
    %v320 = vunpack.c.h.b16 %v248
    %v321 = vunpack.c.l.b16 %v249
    %v322 = vunpack.c.h.b16 %v249
    %v323 = vunpack.c.l.b16 %v250
    %v324 = vunpack.c.h.b16 %v250
    %v325 = vunpack.c.l.b16 %v251
    %v326 = vunpack.c.h.b16 %v251
    %v327 = vunpack.c.l.b16 %v252
    %v328 = vunpack.c.h.b16 %v252
    %v329 = vunpack.c.l.b16 %v253
    %v330 = vunpack.c.h.b16 %v253
    %v331 = vunpack.c.l.b16 %v254
    %v332 = vunpack.c.h.b16 %v254
    %v333 = vunpack.c.l.b16 %v255
    %v334 = vunpack.c.h.b16 %v255
    %v335 = vunpack.c.l.b16 %v256
    %v336 = vunpack.c.h.b16 %v256
    %v337 = vunpack.c.l.b16 %v257
    %v338 = vunpack.c.h.b16 %v257
    %v339 = vunpack.c.l.b16 %v258
    %v340 = vunpack.c.h.b16 %v258
    %v341 = vunpack.c.l.b16 %v259
    %v342 = vunpack.c.h.b16 %v259
    %v343 = vunpack.c.l.b16 %v260
    %v344 = vunpack.c.h.b16 %v260
    %v345 = vunpack.c.l.b16 %v261
    %v346 = vunpack.c.h.b16 %v261
    %v347 = vunpack.c.l.b16 %v262
    %v348 = vunpack.c.h.b16 %v262
    %v349 = vunpack.c.l.b16 %v263
    %v350 = vunpack.c.h.b16 %v263
    %v351 = vunpack.c.l.b16 %v264
    %v352 = vunpack.c.h.b16 %v264
    %v353 = vunpack.c.l.b16 %v265
    %v354 = vunpack.c.h.b16 %v265
    %v355 = vunpack.c.l.b16 %v266
    %v356 = vunpack.c.h.b16 %v266
    %v357 = vunpack.c.l.b16 %v267
    %v358 = vunpack.c.h.b16 %v267
    %v359 = vunpack.c.l.b16 %v268
    %v360 = vunpack.c.h.b16 %v268
    %v361 = vunpack.c.l.b16 %v269
    %v362 = vunpack.c.h.b16 %v269
    %v363 = vunpack.c.l.b16 %v270
    %v364 = vunpack.c.h.b16 %v270
    %v365 = vunpack.c.l.b16 %v271
    %v366 = vunpack.c.h.b16 %v271
    %v367 = vunpack.c.l.b16 %v272
    %v368 = vunpack.c.h.b16 %v272
    %v369 = vunpack.c.l.b16 %v273
    %v370 = vunpack.c.h.b16 %v273
    %v371 = vunpack.c.l.b16 %v274
    %v372 = vunpack.c.h.b16 %v274
    %v373 = vunpack.c.l.b16 %v275
    %v374 = vunpack.c.h.b16 %v275
    %v375 = vunpack.c.l.b16 %v276
    %v376 = vunpack.c.h.b16 %v276
    %v377 = vunpack.c.l.b16 %v277
    %v378 = vunpack.c.h.b16 %v277
    %v379 = vunpack.c.l.b16 %v278
    %v380 = vunpack.c.h.b16 %v278
    %v381 = vpack.c.b16 %v319, %v317
    %v382 = vpack.c.b16 %v320, %v318
    %v383 = vpack.c.b16 %v323, %v321
    %v384 = vpack.c.b16 %v324, %v322
    %v385 = vpack.c.b16 %v327, %v325
    %v386 = vpack.c.b16 %v328, %v326
    %v387 = vpack.c.b16 %v331, %v329
    %v388 = vpack.c.b16 %v332, %v330
    %v389 = vpack.c.b16 %v335, %v333
    %v390 = vpack.c.b16 %v336, %v334
    %v391 = vpack.c.b16 %v339, %v337
    %v392 = vpack.c.b16 %v340, %v338
    %v393 = vpack.c.b16 %v343, %v341
    %v394 = vpack.c.b16 %v344, %v342
    %v395 = vpack.c.b16 %v347, %v345
    %v396 = vpack.c.b16 %v348, %v346
    %v397 = vpack.c.b16 %v351, %v349
    %v398 = vpack.c.b16 %v352, %v350
    %v399 = vpack.c.b16 %v355, %v353
    %v400 = vpack.c.b16 %v356, %v354
    %v401 = vpack.c.b16 %v359, %v357
    %v402 = vpack.c.b16 %v360, %v358
    %v403 = vpack.c.b16 %v363, %v361
    %v404 = vpack.c.b16 %v364, %v362
    %v405 = vpack.c.b16 %v367, %v365
    %v406 = vpack.c.b16 %v368, %v366
    %v407 = vpack.c.b16 %v371, %v369
    %v408 = vpack.c.b16 %v372, %v370
    %v409 = vpack.c.b16 %v375, %v373
    %v410 = vpack.c.b16 %v376, %v374
    %v411 = vpack.c.b16 %v379, %v377
    %v412 = vpack.c.b16 %v380, %v378
    %445 = vmatpush.bf16.msra.mxu0 %v395
    %446 = vmatpush.bf16.msra.mxu0 %v393
    %447 = vmatpush.bf16.msra.mxu0 %v391
    %448 = vmatpush.bf16.msra.mxu0 %v389
    %449 = vmatpush.bf16.msra.mxu0 %v387
    %450 = vmatpush.bf16.msra.mxu0 %v385
    %451 = vmatpush.bf16.msra.mxu0 %v383
    %452 = vmatpush.bf16.msra.mxu0 %v381
    %453 = vmatmul.bf16.gmra.mxu0 %v245
    %v454 = vpop.f32.mrf.mxu0
    %v455 = vadd.f32 %v281, %v454
    %v456 = vpop.f32.mrf.mxu0
    %v457 = vadd.f32 %v281, %v456
    %458 = vdwg.mxu0
    %459 = vmatpush.bf16.msra.mxu0 %v411
    %460 = vmatpush.bf16.msra.mxu0 %v409
    %461 = vmatpush.bf16.msra.mxu0 %v407
    %462 = vmatpush.bf16.msra.mxu0 %v405
    %463 = vmatpush.bf16.msra.mxu0 %v403
    %464 = vmatpush.bf16.msra.mxu0 %v401
    %465 = vmatpush.bf16.msra.mxu0 %v399
    %466 = vmatpush.bf16.msra.mxu0 %v397
    %467 = vmatmul.bf16.gmra.mxu0 %v246
    %v468 = vpop.f32.mrf.mxu0
    %v469 = vadd.f32 %v455, %v468
    %v470 = vpop.f32.mrf.mxu0
    %v471 = vadd.f32 %v457, %v470
    %472 = vdwg.mxu0
    %473 = vmatpush.bf16.msra.mxu0 %v396
    %474 = vmatpush.bf16.msra.mxu0 %v394
    %475 = vmatpush.bf16.msra.mxu0 %v392
    %476 = vmatpush.bf16.msra.mxu0 %v390
    %477 = vmatpush.bf16.msra.mxu0 %v388
    %478 = vmatpush.bf16.msra.mxu0 %v386
    %479 = vmatpush.bf16.msra.mxu0 %v384
    %480 = vmatpush.bf16.msra.mxu0 %v382
    %481 = vmatmul.bf16.gmra.mxu0 %v245
    %v482 = vpop.f32.mrf.mxu0
    %v483 = vadd.f32 %v282, %v482
    %v484 = vpop.f32.mrf.mxu0
    %v485 = vadd.f32 %v282, %v484
    %486 = vdwg.mxu0
    %487 = vmatpush.bf16.msra.mxu0 %v412
    %488 = vmatpush.bf16.msra.mxu0 %v410
    %489 = vmatpush.bf16.msra.mxu0 %v408
    %490 = vmatpush.bf16.msra.mxu0 %v406
    %491 = vmatpush.bf16.msra.mxu0 %v404
    %492 = vmatpush.bf16.msra.mxu0 %v402
    %493 = vmatpush.bf16.msra.mxu0 %v400
    %494 = vmatpush.bf16.msra.mxu0 %v398
    %495 = vmatmul.bf16.gmra.mxu0 %v246
    %v496 = vpop.f32.mrf.mxu0
    %v497 = vadd.f32 %v483, %v496
    %v498 = vpop.f32.mrf.mxu0
    %v499 = vadd.f32 %v485, %v498
    %500 = vdwg.mxu0
    %v501 = vmax.f32 %v469, 0.0
    %v502 = vmax.f32 %v497, 0.0
    %v503 = vmax.f32 %v471, 0.0
    %v504 = vmax.f32 %v499, 0.0
    %v505 = vpack.c.bf16 %v503, %v501
    %v506 = vpack.c.bf16 %v504, %v502
    %v507 = vld [vmem:[#allocation10] sm:$0xf]
    %v508 = vld [vmem:[#allocation10 + $0x4] sm:$0xf]
    %v509 = vld [vmem:[#allocation10 + $0x8] sm:$0xf]
    %v510 = vld [vmem:[#allocation10 + $0xc] sm:$0xf]
    %v511 = vld [vmem:[#allocation10 + $0x10] sm:$0xf]
    %v512 = vld [vmem:[#allocation10 + $0x14] sm:$0xf]
    %v513 = vld [vmem:[#allocation10 + $0x18] sm:$0xf]
    %v514 = vld [vmem:[#allocation10 + $0x1c] sm:$0xf]
    %v515 = vld [vmem:[#allocation10 + $0x20] sm:$0xf]
    %v516 = vld [vmem:[#allocation10 + $0x24] sm:$0xf]
    %v517 = vld [vmem:[#allocation10 + $0x28] sm:$0xf]
    %v518 = vld [vmem:[#allocation10 + $0x2c] sm:$0xf]
    %v519 = vld [vmem:[#allocation10 + $0x30] sm:$0xf]
    %v520 = vld [vmem:[#allocation10 + $0x34] sm:$0xf]
    %v521 = vld [vmem:[#allocation10 + $0x38] sm:$0xf]
    %v522 = vld [vmem:[#allocation10 + $0x3c] sm:$0xf]
    %v523 = vld [vmem:[#allocation10 + $0x40] sm:$0xf]
    %v524 = vld [vmem:[#allocation10 + $0x44] sm:$0xf]
    %v525 = vld [vmem:[#allocation10 + $0x48] sm:$0xf]
    %v526 = vld [vmem:[#allocation10 + $0x4c] sm:$0xf]
    %v527 = vld [vmem:[#allocation10 + $0x50] sm:$0xf]
    %v528 = vld [vmem:[#allocation10 + $0x54] sm:$0xf]
    %v529 = vld [vmem:[#allocation10 + $0x58] sm:$0xf]
    %v530 = vld [vmem:[#allocation10 + $0x5c] sm:$0xf]
    %v531 = vld [vmem:[#allocation10 + $0x60] sm:$0xf]
    %v532 = vld [vmem:[#allocation10 + $0x64] sm:$0xf]
    %v533 = vld [vmem:[#allocation10 + $0x68] sm:$0xf]
    %v534 = vld [vmem:[#allocation10 + $0x6c] sm:$0xf]
    %v535 = vld [vmem:[#allocation10 + $0x70] sm:$0xf]
    %v536 = vld [vmem:[#allocation10 + $0x74] sm:$0xf]
    %v537 = vld [vmem:[#allocation10 + $0x78] sm:$0xf]
    %v538 = vld [vmem:[#allocation10 + $0x7c] sm:$0xf]
    %v539 = vld [vmem:[%s6] sm:$0x1]
    %v541 = vperm.slane %v539, 0
    %v575 = vunpack.c.l.b16 %v507
    %v576 = vunpack.c.l.b16 %v508
    %v577 = vunpack.c.l.b16 %v509
    %v578 = vunpack.c.l.b16 %v510
    %v579 = vunpack.c.l.b16 %v511
    %v580 = vunpack.c.l.b16 %v512
    %v581 = vunpack.c.l.b16 %v513
    %v582 = vunpack.c.l.b16 %v514
    %v583 = vunpack.c.l.b16 %v515
    %v584 = vunpack.c.l.b16 %v516
    %v585 = vunpack.c.l.b16 %v517
    %v586 = vunpack.c.l.b16 %v518
    %v587 = vunpack.c.l.b16 %v519
    %v588 = vunpack.c.l.b16 %v520
    %v589 = vunpack.c.l.b16 %v521
    %v590 = vunpack.c.l.b16 %v522
    %v591 = vunpack.c.l.b16 %v523
    %v592 = vunpack.c.l.b16 %v524
    %v593 = vunpack.c.l.b16 %v525
    %v594 = vunpack.c.l.b16 %v526
    %v595 = vunpack.c.l.b16 %v527
    %v596 = vunpack.c.l.b16 %v528
    %v597 = vunpack.c.l.b16 %v529
    %v598 = vunpack.c.l.b16 %v530
    %v599 = vunpack.c.l.b16 %v531
    %v600 = vunpack.c.l.b16 %v532
    %v601 = vunpack.c.l.b16 %v533
    %v602 = vunpack.c.l.b16 %v534
    %v603 = vunpack.c.l.b16 %v535
    %v604 = vunpack.c.l.b16 %v536
    %v605 = vunpack.c.l.b16 %v537
    %v606 = vunpack.c.l.b16 %v538
    %v607 = vpack.c.b16 %v576, %v575
    %v608 = vpack.c.b16 %v578, %v577
    %v609 = vpack.c.b16 %v580, %v579
    %v610 = vpack.c.b16 %v582, %v581
    %v611 = vpack.c.b16 %v584, %v583
    %v612 = vpack.c.b16 %v586, %v585
    %v613 = vpack.c.b16 %v588, %v587
    %v614 = vpack.c.b16 %v590, %v589
    %v615 = vpack.c.b16 %v592, %v591
    %v616 = vpack.c.b16 %v594, %v593
    %v617 = vpack.c.b16 %v596, %v595
    %v618 = vpack.c.b16 %v598, %v597
    %v619 = vpack.c.b16 %v600, %v599
    %v620 = vpack.c.b16 %v602, %v601
    %v621 = vpack.c.b16 %v604, %v603
    %v622 = vpack.c.b16 %v606, %v605
    %639 = vmatpush.bf16.msra.mxu0 %v614
    %640 = vmatpush.bf16.msra.mxu0 %v613
    %641 = vmatpush.bf16.msra.mxu0 %v612
    %642 = vmatpush.bf16.msra.mxu0 %v611
    %643 = vmatpush.bf16.msra.mxu0 %v610
    %644 = vmatpush.bf16.msra.mxu0 %v609
    %645 = vmatpush.bf16.msra.mxu0 %v608
    %646 = vmatpush.bf16.msra.mxu0 %v607
    %647 = vmatmul.bf16.gmra.mxu0 %v505
    %v648 = vpop.f32.mrf.mxu0
    %v649 = vadd.f32 %v541, %v648
    %v650 = vpop.f32.mrf.mxu0
    %v651 = vadd.f32 %v541, %v650
    %652 = vdwg.mxu0
    %653 = vmatpush.bf16.msra.mxu0 %v622
    %654 = vmatpush.bf16.msra.mxu0 %v621
    %655 = vmatpush.bf16.msra.mxu0 %v620
    %656 = vmatpush.bf16.msra.mxu0 %v619
    %657 = vmatpush.bf16.msra.mxu0 %v618
    %658 = vmatpush.bf16.msra.mxu0 %v617
    %659 = vmatpush.bf16.msra.mxu0 %v616
    %660 = vmatpush.bf16.msra.mxu0 %v615
    %661 = vmatmul.bf16.gmra.mxu0 %v506
    %v662 = vpop.f32.mrf.mxu0
    %v663 = vadd.f32 %v649, %v662
    %v664 = vpop.f32.mrf.mxu0
    %v665 = vadd.f32 %v651, %v664
    %666 = vdwg.mxu0
    %v667 = vlaneseq
    %v668 = vand.u32 %v667, 127
    %vm669 = vcmp.ge.s32.totalorder %v668, 0
    %vm670 = vcmp.lt.s32.totalorder %v668, 2
    %vm671 = vmand %vm669, %vm670
    %vm672 = vcmp.ge.s32.totalorder %v668, 3
    %vm673 = vcmp.lt.s32.totalorder %v668, 5
    %vm674 = vmand %vm672, %vm673
    %vm675 = vmor %vm671, %vm674
    %vm676 = vcmp.ge.s32.totalorder %v668, 2
    %vm677 = vcmp.lt.s32.totalorder %v668, 3
    %vm678 = vmand %vm676, %vm677
    %vm679 = vcmp.ge.s32.totalorder %v668, 5
    %vm680 = vcmp.lt.s32.totalorder %v668, 6
    %vm681 = vmand %vm679, %vm680
    %vm682 = vcmp.ge.s32.totalorder %v668, 6
    %vm683 = vcmp.lt.s32.totalorder %v668, 14
    %vm684 = vmand %vm682, %vm683
    %vm685 = vcmp.ge.s32.totalorder %v668, 14
    %vm686 = vcmp.lt.s32.totalorder %v668, 19
    %vm687 = vmand %vm685, %vm686
    %vm688 = vmor %vm684, %vm687
    %v689 = vmul.f32 %v663, 2.0
    %v690 = vmul.f32 %v665, 2.0
    %v691 = vsel %vm675, %v689, %v663
    %v692 = vsel %vm675, %v690, %v665
    %v693 = vxor.u32 %v691, 2147483648
    %v694 = vxor.u32 %v692, 2147483648
    %v695 = vmul.f32 %v693, 1.442695
    %v696 = vpow.pop %v695
    %v697 = vmul.f32 %v694, 1.442695
    %v698 = vpow.pop %v697
    %v699 = vadd.f32 %v696, 1.0
    %v700 = vadd.f32 %v698, 1.0
    %v701 = vrcp.pop %v699
    %v702 = vmul.f32 %v699, %v701
    %v703 = vsub.f32 1.0, %v702
    %v704 = vmul.f32 %v701, %v703
    %v705 = vadd.f32 %v701, %v704
    %vm706 = vweird.f32 %v699
    %vm707 = vweird.f32 %v701
    %vm708 = vmor %vm706, %vm707
    %v709 = vsel %vm708, %v701, %v705
    %v710 = vand.u32 2147483647, %v699
    %vm711 = vcmp.eq.f32.partialorder %v710, 8.507059e+37
    %v712 = vand.u32 %v699, 2147483648
    %v713 = vor.u32 1.1754944e-38, %v712
    %v714 = vsel %vm711, %v713, %v709
    %v715 = vmul.f32 1.0, %v714
    %v716 = vrcp.pop %v700
    %v717 = vmul.f32 %v700, %v716
    %v718 = vsub.f32 1.0, %v717
    %v719 = vmul.f32 %v716, %v718
    %v720 = vadd.f32 %v716, %v719
    %vm721 = vweird.f32 %v700
    %vm722 = vweird.f32 %v716
    %vm723 = vmor %vm721, %vm722
    %v724 = vsel %vm723, %v716, %v720
    %v725 = vand.u32 2147483647, %v700
    %vm726 = vcmp.eq.f32.partialorder %v725, 8.507059e+37
    %v727 = vand.u32 %v700, 2147483648
    %v728 = vor.u32 1.1754944e-38, %v727
    %v729 = vsel %vm726, %v728, %v724
    %v730 = vmul.f32 1.0, %v729
    %v731 = vsel %vm684, %v663, -1e+30
    %v732 = vsel %vm684, %v665, -1e+30
    %733 = vmax.xlane.f32.xlu0 %v731
    %v734 = vpop.xlane.xlu0 %733
    %735 = vmax.xlane.f32.xlu0 %v732
    %v736 = vpop.xlane.xlu0 %735
    %v737 = vsel %vm687, %v663, -1e+30
    %v738 = vsel %vm687, %v665, -1e+30
    %739 = vmax.xlane.f32.xlu0 %v737
    %v740 = vpop.xlane.xlu0 %739
    %741 = vmax.xlane.f32.xlu0 %v738
    %v742 = vpop.xlane.xlu0 %741
    %v743 = vsel %vm684, %v734, %v740
    %v744 = vsel %vm684, %v736, %v742
    %v745 = vsel %vm688, %v663, -1e+30
    %v746 = vsel %vm688, %v665, -1e+30
    %v747 = vsub.f32 %v745, %v743
    %v748 = vsub.f32 %v746, %v744
    %v749 = vmul.f32 %v747, 1.442695
    %v750 = vpow.pop %v749
    %v751 = vmul.f32 %v748, 1.442695
    %v752 = vpow.pop %v751
    %v753 = vsel %vm684, %v750, 0.0
    %v754 = vsel %vm684, %v752, 0.0
    %755 = vadd.xlane.f32.xlu0 %v753
    %v756 = vpop.xlane.xlu0 %755
    %757 = vadd.xlane.f32.xlu0 %v754
    %v758 = vpop.xlane.xlu0 %757
    %759 = vadd.xlane.f32.xlu0 %v750
    %v760 = vpop.xlane.xlu0 %759
    %761 = vadd.xlane.f32.xlu0 %v752
    %v762 = vpop.xlane.xlu0 %761
    %v763 = vsub.f32 %v760, %v756
    %v764 = vsub.f32 %v762, %v758
    %v765 = vrcp.pop %v756
    %v766 = vmul.f32 %v756, %v765
    %v767 = vsub.f32 1.0, %v766
    %v768 = vmul.f32 %v765, %v767
    %v769 = vadd.f32 %v765, %v768
    %vm770 = vweird.f32 %v756
    %vm771 = vweird.f32 %v765
    %vm772 = vmor %vm770, %vm771
    %v773 = vsel %vm772, %v765, %v769
    %v774 = vand.u32 2147483647, %v756
    %vm775 = vcmp.eq.f32.partialorder %v774, 8.507059e+37
    %v776 = vand.u32 %v756, 2147483648
    %v777 = vor.u32 1.1754944e-38, %v776
    %v778 = vsel %vm775, %v777, %v773
    %v779 = vrcp.pop %v758
    %v780 = vmul.f32 %v758, %v779
    %v781 = vsub.f32 1.0, %v780
    %v782 = vmul.f32 %v779, %v781
    %v783 = vadd.f32 %v779, %v782
    %vm784 = vweird.f32 %v758
    %vm785 = vweird.f32 %v779
    %vm786 = vmor %vm784, %vm785
    %v787 = vsel %vm786, %v779, %v783
    %v788 = vand.u32 2147483647, %v758
    %vm789 = vcmp.eq.f32.partialorder %v788, 8.507059e+37
    %v790 = vand.u32 %v758, 2147483648
    %v791 = vor.u32 1.1754944e-38, %v790
    %v792 = vsel %vm789, %v791, %v787
    %v793 = vrcp.pop %v763
    %v794 = vmul.f32 %v763, %v793
    %v795 = vsub.f32 1.0, %v794
    %v796 = vmul.f32 %v793, %v795
    %v797 = vadd.f32 %v793, %v796
    %vm798 = vweird.f32 %v763
    %vm799 = vweird.f32 %v793
    %vm800 = vmor %vm798, %vm799
    %v801 = vsel %vm800, %v793, %v797
    %v802 = vand.u32 2147483647, %v763
    %vm803 = vcmp.eq.f32.partialorder %v802, 8.507059e+37
    %v804 = vand.u32 %v763, 2147483648
    %v805 = vor.u32 1.1754944e-38, %v804
    %v806 = vsel %vm803, %v805, %v801
    %v807 = vrcp.pop %v764
    %v808 = vmul.f32 %v764, %v807
    %v809 = vsub.f32 1.0, %v808
    %v810 = vmul.f32 %v807, %v809
    %v811 = vadd.f32 %v807, %v810
    %vm812 = vweird.f32 %v764
    %vm813 = vweird.f32 %v807
    %vm814 = vmor %vm812, %vm813
    %v815 = vsel %vm814, %v807, %v811
    %v816 = vand.u32 2147483647, %v764
    %vm817 = vcmp.eq.f32.partialorder %v816, 8.507059e+37
    %v818 = vand.u32 %v764, 2147483648
    %v819 = vor.u32 1.1754944e-38, %v818
    %v820 = vsel %vm817, %v819, %v815
    %v821 = vsel %vm684, %v778, %v806
    %v822 = vsel %vm684, %v792, %v820
    %v823 = vmul.f32 %v750, %v821
    %v824 = vmul.f32 %v752, %v822
    %v825 = vmul.f32 %v715, 2.0
    %v826 = vmul.f32 %v730, 2.0
    %v827 = vsub.f32 %v825, 1.0
    %v828 = vsub.f32 %v826, 1.0
    %v829 = vsel %vm675, %v827, 0.0
    %v830 = vsel %vm675, %v828, 0.0
    %v831 = vsel %vm678, %v715, %v829
    %v832 = vsel %vm678, %v730, %v830
    %v833 = vmul.f32 %v715, 5.0
    %v834 = vmul.f32 %v730, 5.0
    %v835 = vsel %vm681, %v833, %v831
    %v836 = vsel %vm681, %v834, %v832
    %v837 = vsel %vm688, %v823, %v835
    %v838 = vsel %vm688, %v824, %v836
    %839 = vst [vmem:[#allocation11] sm:$0xff] %v837
    %840 = vst [vmem:[#allocation11 + $0x8] sm:$0xff] %v838
    // Predicated region
    $region50: #{tpu_custom_call.1} parent=1 // pred_check
      _
    $region51: #{tpu_custom_call.1} parent=1 // pred_check_branch
      %842 = sbr.rel (0) target = $region53
    $region52: #{tpu_custom_call.1} parent=1 // pred_region
      %844 = vsyncadd [#allocation4], 0
      %s845 = sshll.u32 [#allocation11], 4
      %s846 = int_to_ptr.vmem [resolvable:$true] %s845
      %s847 = sshll.u32 %s7, 4
      %s848 = int_to_ptr.hbm [resolvable:$true] %s847
      %853 = dma.vmem_to_hbm [thread:$0]  %s846, 256, %s848, [#allocation4], 128, 128, 8
    $region53: #{tpu_custom_call.1} parent=1 // pred_fallthru
      _
    // Predicated region
    $region54: #{tpu_custom_call.1} parent=1 // pred_check
      _
    $region55: #{tpu_custom_call.1} parent=1 // pred_check_branch
      %855 = sbr.rel (0) target = $region57
    $region56: #{tpu_custom_call.1} parent=1 // pred_region
      %857 = dma.done [#allocation4], 256
    $region57: #{tpu_custom_call.1} parent=1 // pred_fallthru
      _
    %858 = vsyncpa [#allocation3], 1
    %859 = vsyncpa [#allocation6], 1
    %860 = vsyncpa [#allocation9], 1
    %861 = vsyncpa [#allocation4], 1

</llo_original>
